<compile_context>
chip_gen: v7x
topology: tpu7x:2x2x1
jax: 0.10.0
libtpu: 0.0.40
codegen_flags: <defaults>
</compile_context>

<pallas_src>
import functools

import jax
import jax.numpy as jnp
from jax.experimental import pallas as pl
from jax.experimental.pallas import tpu as pltpu


_INV_SQRT2 = 0.7071067811865476


def _gelu(x, approximate):
    if approximate:
        # tanh approximation: transcendental goes to the EUP slot, much lighter
        # on the VALU than the erf polynomial; small deviation from torch's
        # exact GELU (kept behind a flag).
        return jax.nn.gelu(x, approximate=True)
    # Exact erf-based GELU, matches torch.nn.GELU() default.
    return 0.5 * x * (1.0 + jax.lax.erf(x * jnp.asarray(_INV_SQRT2, x.dtype)))


def _e_u_block(h_ref, t_ref, wh_ref, wt_ref, wth_ref, b1_ref, w2_ref, b2_ref,
               approximate_gelu):
    # h_ref  : (TB, S, F) f32/bf16   historical_combined block
    # t_ref  : (TB, F)    f32/bf16   target embedding block
    # wh_ref : (F, F) compute dtype  = W1a - W1c   (multiplies h)
    # wt_ref : (F, F) compute dtype  = W1b + W1c   (multiplies t)
    # wth_ref: (F, F) compute dtype  = W1d         (multiplies t*h)
    # b1_ref : (1, F) f32
    # w2_ref : (1, F) f32            fc2 weight as a row vector
    # b2_ref : (1, 1) f32            in SMEM
    TB, S, F = h_ref.shape
    cdt = wh_ref.dtype

    h_in = h_ref[...]                              # (TB, S, F) input dtype
    t_in = t_ref[...]                              # (TB, F)

    # Matmul operands in the compute dtype; t*h formed directly in it.
    h_c = h_in.astype(cdt)
    t_c = t_in.astype(cdt)
    th_c = t_c[:, None, :] * h_c                   # (TB, S, F) cdt

    # S is a multiple of 8 (wrapper pads), so these reshapes are layout-free.
    h_flat = h_c.reshape(TB * S, F)
    th_flat = th_c.reshape(TB * S, F)

    # fc1 with the lane concat eliminated algebraically:
    #   concat([h, t, t-h, t*h]) @ W1
    #     = h @ (W1a - W1c) + (t*h) @ W1d + (t @ (W1b + W1c) + b1)
    hid = jnp.dot(h_flat, wh_ref[...], preferred_element_type=jnp.float32)
    hid = hid + jnp.dot(th_flat, wth_ref[...], preferred_element_type=jnp.float32)
    t_proj = jnp.dot(t_c, wt_ref[...], preferred_element_type=jnp.float32)
    t_proj = t_proj + b1_ref[...]                  # (TB, F) f32
    hid = hid.reshape(TB, S, F) + t_proj[:, None, :]

    act = _gelu(hid, approximate_gelu)             # f32

    # fc2 (F -> 1) as a VPU multiply + lane reduce instead of an N=1 matmul.
    logits = jnp.sum(act * w2_ref[...], axis=-1, keepdims=True)   # (TB, S, 1)

    # e_u = sum_s((logits + b2) * h)  (b2 folded in); zero-padded history rows
    # contribute exactly 0 because h == 0 there.
    b2 = b2_ref[0, 0]
    return jnp.sum((logits + b2) * h_in.astype(jnp.float32), axis=1)  # (TB, F)


def _user_interest_kernel(h_ref, t_ref, wh_ref, wt_ref, wth_ref, b1_ref,
                          w2_ref, b2_ref, out_ref, *, approximate_gelu):
    e_u = _e_u_block(h_ref, t_ref, wh_ref, wt_ref, wth_ref, b1_ref, w2_ref,
                     b2_ref, approximate_gelu)
    out_ref[...] = e_u.astype(out_ref.dtype)


def _fused_interest_kernel(h_ref, t_ref, eup_ref, wh_ref, wt_ref, wth_ref,
                           b1_ref, w2_ref, b2_ref, out_ref, *,
                           approximate_gelu):
    F = h_ref.shape[-1]
    e_u = _e_u_block(h_ref, t_ref, wh_ref, wt_ref, wth_ref, b1_ref, w2_ref,
                     b2_ref, approximate_gelu)
    out_ref[:, :F] = e_u.astype(out_ref.dtype)
    out_ref[:, F:] = eup_ref[...].astype(out_ref.dtype)


def _pick_block_b(B, S, F, in_itemsize):
    """Largest multiple-of-8 divisor of B fitting a VMEM budget, while leaving
    >= 2 (v7x megacore) / >= 4 (DMA pipelining) grid steps when B allows."""
    # Rough per-batch-row VMEM: double-buffered input slab + ~4 f32 (S, F)
    # intermediates (th/hid/act live ranges) + small output rows.
    per_b = S * F * (2 * in_itemsize + 4 * 4) + 16 * F
    cap = max(8, (10 << 20) // max(per_b, 1))
    cap = min(cap, max(8, 2048 // max(S, 1)))      # keep matmul M reasonable
    if B >= 32:
        cap = min(cap, B // 4)
    elif B >= 16:
        cap = min(cap, B // 2)
    best = 0
    d = 8
    while d <= cap:
        if B % d == 0:
            best = d
        d += 8
    if best:
        return best
    if B % 8 == 0:
        return 8
    return B        # tiny batch: single grid step, tb == B


def _pad_history(historical):
    """Pad the history axis to a multiple of 8 (sublane tile) with zero rows.

    Zero rows are exactly neutral (multiplied by h == 0 in the weighted sum),
    so no masking is needed and the in-kernel reshape stays layout-free."""
    S = historical.shape[1]
    pad = (-S) % 8
    if pad:
        historical = jnp.pad(historical, ((0, 0), (0, pad), (0, 0)))
    return historical


def _prep_params(w1, b1, w2, b2, F, compute_dtype):
    assert w1.shape == (4 * F, F), w1.shape
    assert w2.shape == (F, 1), w2.shape
    w1 = jnp.asarray(w1, jnp.float32)
    w1a, w1b, w1c, w1d = w1[0:F], w1[F:2 * F], w1[2 * F:3 * F], w1[3 * F:4 * F]
    # Recombine in f32 (concat order [h, t, t-h, t*h]); cast once afterwards.
    wh = (w1a - w1c).astype(compute_dtype)      # multiplies h
    wt = (w1b + w1c).astype(compute_dtype)      # multiplies t
    wth = w1d.astype(compute_dtype)             # multiplies t*h
    b1v = jnp.asarray(b1, jnp.float32).reshape(1, F)
    w2v = jnp.asarray(w2, jnp.float32).reshape(1, F)
    b2v = jnp.asarray(b2, jnp.float32).reshape(1, 1)
    return wh, wt, wth, b1v, w2v, b2v


def _resolve_tb(B, S, F, itemsize, block_b):
    tb = block_b if block_b is not None else _pick_block_b(B, S, F, itemsize)
    assert B % tb == 0 and (tb == B or tb % 8 == 0), (
        "block_b must divide B and be a multiple of 8 (or equal B)")
    return tb


_COMPILER_PARAMS = pltpu.CompilerParams(
    dimension_semantics=("parallel",),
    vmem_limit_bytes=32 * 1024 * 1024)


def user_side_interest(historical, target, w1, b1, w2, b2, *,
                       block_b=None, compute_dtype=jnp.bfloat16,
                       approximate_gelu=False, out_dtype=jnp.float32):
    """UserSideInterest head: (B, S, F), (B, F) -> e_u (B, F)."""
    B, S, F = historical.shape
    historical = _pad_history(historical)
    S = historical.shape[1]
    wh, wt, wth, b1v, w2v, b2v = _prep_params(w1, b1, w2, b2, F, compute_dtype)
    tb = _resolve_tb(B, S, F, jnp.dtype(historical.dtype).itemsize, block_b)

    kernel = functools.partial(_user_interest_kernel,
                               approximate_gelu=approximate_gelu)
    return pl.pallas_call(
        kernel,
        out_shape=jax.ShapeDtypeStruct((B, F), out_dtype),
        grid_spec=pltpu.PrefetchScalarGridSpec(
            num_scalar_prefetch=0,
            grid=(B // tb,),
            in_specs=[
                pl.BlockSpec((tb, S, F), lambda b: (b, 0, 0)),   # historical
                pl.BlockSpec((tb, F), lambda b: (b, 0)),         # target (2-D)
                pl.BlockSpec((F, F), lambda b: (0, 0)),          # wh (resident)
                pl.BlockSpec((F, F), lambda b: (0, 0)),          # wt
                pl.BlockSpec((F, F), lambda b: (0, 0)),          # wth
                pl.BlockSpec((1, F), lambda b: (0, 0)),          # b1
                pl.BlockSpec((1, F), lambda b: (0, 0)),          # w2 row
                pl.BlockSpec(memory_space=pltpu.SMEM),           # b2 scalar
            ],
            out_specs=pl.BlockSpec((tb, F), lambda b: (b, 0)),
        ),
        compiler_params=_COMPILER_PARAMS,
    )(historical, target, wh, wt, wth, b1v, w2v, b2v)


def historic_user_interest(historical, target, w1, b1, w2, b2, e_u_prime, *,
                           block_b=None, compute_dtype=jnp.bfloat16,
                           approximate_gelu=False, out_dtype=jnp.float32):
    """HistoricUserInterest.forward: e_u + concat([e_u, e_u_prime], -1),
    with the concat fused into the kernel (no extra HBM pass)."""
    # TODO(synk): multimodal_interest and the id->embedding lookups inside
    # user_side_interest are externally injected torch modules with no
    # definition in the spec; their outputs are taken as inputs here.
    B, S, F = historical.shape
    F2 = e_u_prime.shape[-1]
    historical = _pad_history(historical)
    S = historical.shape[1]
    wh, wt, wth, b1v, w2v, b2v = _prep_params(w1, b1, w2, b2, F, compute_dtype)
    tb = _resolve_tb(B, S, F, jnp.dtype(historical.dtype).itemsize, block_b)

    kernel = functools.partial(_fused_interest_kernel,
                               approximate_gelu=approximate_gelu)
    return pl.pallas_call(
        kernel,
        out_shape=jax.ShapeDtypeStruct((B, F + F2), out_dtype),
        grid_spec=pltpu.PrefetchScalarGridSpec(
            num_scalar_prefetch=0,
            grid=(B // tb,),
            in_specs=[
                pl.BlockSpec((tb, S, F), lambda b: (b, 0, 0)),   # historical
                pl.BlockSpec((tb, F), lambda b: (b, 0)),         # target
                pl.BlockSpec((tb, F2), lambda b: (b, 0)),        # e_u_prime
                pl.BlockSpec((F, F), lambda b: (0, 0)),          # wh
                pl.BlockSpec((F, F), lambda b: (0, 0)),          # wt
                pl.BlockSpec((F, F), lambda b: (0, 0)),          # wth
                pl.BlockSpec((1, F), lambda b: (0, 0)),          # b1
                pl.BlockSpec((1, F), lambda b: (0, 0)),          # w2 row
                pl.BlockSpec(memory_space=pltpu.SMEM),           # b2 scalar
            ],
            out_specs=pl.BlockSpec((tb, F + F2), lambda b: (b, 0)),
        ),
        compiler_params=_COMPILER_PARAMS,
    )(historical, target, e_u_prime, wh, wt, wth, b1v, w2v, b2v)


def _reference_f32(historical, target, w1, b1, w2, b2):
    B, S, F = historical.shape
    t_exp = jnp.broadcast_to(target[:, None, :], (B, S, F))
    concat = jnp.concatenate(
        [historical, t_exp, t_exp - historical, t_exp * historical], axis=-1)
    hid = concat @ w1 + b1
    act = _gelu(hid, approximate=False)
    logits = act @ w2 + b2                          # (B, S, 1)
    return jnp.sum(logits * historical, axis=1)     # (B, F)


if __name__ == "__main__":
    # Small shapes consistent with the module:
    #   embedding_dim E = 32  ->  combined feature dim F = 4*E = 128
    #   batch B = 16 (grid of 2 blocks), history length S = 8, multimodal F2 = 64
    B, S, E = 16, 8, 32
    F = 4 * E
    F2 = 64

    key = jax.random.PRNGKey(0)
    k_h, k_t, k_w1, k_b1, k_w2, k_b2, k_mm = jax.random.split(key, 7)

    historical = jax.random.normal(k_h, (B, S, F), dtype=jnp.float32)
    target = jax.random.normal(k_t, (B, F), dtype=jnp.float32)

    # MLP(input_dim=4F, hidden=F, output=1) parameters, stored as (in, out).
    w1 = 0.05 * jax.random.normal(k_w1, (4 * F, F), dtype=jnp.float32)
    b1 = 0.05 * jax.random.normal(k_b1, (1, F), dtype=jnp.float32)
    w2 = 0.05 * jax.random.normal(k_w2, (F, 1), dtype=jnp.float32)
    b2 = 0.05 * jax.random.normal(k_b2, (1, 1), dtype=jnp.float32)

    e_u_prime = jax.random.normal(k_mm, (B, F2), dtype=jnp.float32)

    ref = _reference_f32(historical, target, w1, b1, w2, b2)

    # 1) f32 compute + exact GELU: tight check of the concat-free reformulation.
    out_f32 = user_side_interest(historical, target, w1, b1, w2, b2,
                                 compute_dtype=jnp.float32,
                                 approximate_gelu=False)
    jax.block_until_ready(out_f32)
    assert out_f32.shape == (B, F)
    assert jnp.allclose(out_f32, ref, atol=1e-3, rtol=1e-3), "f32 mismatch"

    # 2) Performance configuration: producer emits bf16 activations, bf16 MXU
    #    operands (f32 accumulation), tanh-approx GELU on the EUP. Loose check.
    hist_bf16 = historical.astype(jnp.bfloat16)   # simulates a bf16 producer
    targ_bf16 = target.astype(jnp.bfloat16)
    out_perf = user_side_interest(hist_bf16, targ_bf16, w1, b1, w2, b2,
                                  compute_dtype=jnp.bfloat16,
                                  approximate_gelu=True)
    jax.block_until_ready(out_perf)
    assert jnp.allclose(out_perf, ref, atol=1e-1, rtol=1e-1), "perf-path mismatch"

    # 3) Full HistoricUserInterest forward: fused concat with multimodal interest.
    combined = historic_user_interest(hist_bf16, targ_bf16, w1, b1, w2, b2,
                                      e_u_prime, compute_dtype=jnp.bfloat16,
                                      approximate_gelu=True)
    jax.block_until_ready(combined)
    assert combined.shape == (B, F + F2)
    assert jnp.allclose(combined[:, :F], ref, atol=1e-1, rtol=1e-1)
    assert jnp.allclose(combined[:, F:], e_u_prime)

    print("KERNEL_OK")
</pallas_src>

<mosaic_0001>
module attributes {stable_mosaic.version = 11 : i64} {
  func.func @_user_interest_kernel(%arg0: i32, %arg1: memref<8x8x128xf32, #tpu.memory_space<vmem>>, %arg2: memref<8x128xf32, #tpu.memory_space<vmem>>, %arg3: memref<128x128xf32, #tpu.memory_space<vmem>>, %arg4: memref<128x128xf32, #tpu.memory_space<vmem>>, %arg5: memref<128x128xf32, #tpu.memory_space<vmem>>, %arg6: memref<1x128xf32, #tpu.memory_space<vmem>>, %arg7: memref<1x128xf32, #tpu.memory_space<vmem>>, %arg8: memref<1x1xf32, #tpu.memory_space<smem>>, %arg9: memref<8x128xf32, #tpu.memory_space<vmem>>) attributes {dimension_semantics = [#tpu.dimension_semantics<parallel>], iteration_bounds = array<i64: 2>, scalar_prefetch = 0 : i64, scratch_operands = 0 : i64, tpu.core_type = #tpu.core_type<tc>, window_params = [{transform_indices = @transform_0, window_bounds = array<i64: 8, 8, 128>}, {transform_indices = @transform_1, window_bounds = array<i64: 8, 128>}, {pipeline_mode = #tpu.pipeline_mode<synchronous>, transform_indices = @transform_2, window_bounds = array<i64: 128, 128>}, {pipeline_mode = #tpu.pipeline_mode<synchronous>, transform_indices = @transform_3, window_bounds = array<i64: 128, 128>}, {pipeline_mode = #tpu.pipeline_mode<synchronous>, transform_indices = @transform_4, window_bounds = array<i64: 128, 128>}, {pipeline_mode = #tpu.pipeline_mode<synchronous>, transform_indices = @transform_5, window_bounds = array<i64: 1, 128>}, {pipeline_mode = #tpu.pipeline_mode<synchronous>, transform_indices = @transform_6, window_bounds = array<i64: 1, 128>}, {transform_indices = @transform_7, window_bounds = array<i64: 1, 1>}, {transform_indices = @transform_8, window_bounds = array<i64: 8, 128>}]} {
    %c0 = arith.constant 0 : index
    %c0_0 = arith.constant 0 : index
    %c0_1 = arith.constant 0 : index
    %0 = vector.load %arg1[%c0, %c0_0, %c0_1] : memref<8x8x128xf32, #tpu.memory_space<vmem>>, vector<8x8x128xf32>
    %c0_2 = arith.constant 0 : index
    %c0_3 = arith.constant 0 : index
    %1 = vector.load %arg2[%c0_2, %c0_3] : memref<8x128xf32, #tpu.memory_space<vmem>>, vector<8x128xf32>
    %2 = vector.shape_cast %1 : vector<8x128xf32> to vector<8x1x128xf32>
    %3 = vector.broadcast %2 : vector<8x1x128xf32> to vector<8x8x128xf32>
    %4 = arith.mulf %3, %0 : vector<8x8x128xf32>
    %5 = vector.shape_cast %0 : vector<8x8x128xf32> to vector<64x128xf32>
    %6 = vector.shape_cast %4 : vector<8x8x128xf32> to vector<64x128xf32>
    %c0_4 = arith.constant 0 : index
    %c0_5 = arith.constant 0 : index
    %7 = vector.load %arg3[%c0_4, %c0_5] : memref<128x128xf32, #tpu.memory_space<vmem>>, vector<128x128xf32>
    %cst = arith.constant dense<0.000000e+00> : vector<64x128xf32>
    %8 = tpu.matmul %5, %7, %cst {dimension_numbers = #tpu.dot_dimension_numbers<[1], [0], [0], [1], [0, 0, 1, 1], [], []>} : vector<64x128xf32>, vector<128x128xf32>, vector<64x128xf32> -> vector<64x128xf32>
    %c0_6 = arith.constant 0 : index
    %c0_7 = arith.constant 0 : index
    %9 = vector.load %arg5[%c0_6, %c0_7] : memref<128x128xf32, #tpu.memory_space<vmem>>, vector<128x128xf32>
    %cst_8 = arith.constant dense<0.000000e+00> : vector<64x128xf32>
    %10 = tpu.matmul %6, %9, %cst_8 {dimension_numbers = #tpu.dot_dimension_numbers<[1], [0], [0], [1], [0, 0, 1, 1], [], []>} : vector<64x128xf32>, vector<128x128xf32>, vector<64x128xf32> -> vector<64x128xf32>
    %11 = arith.addf %8, %10 : vector<64x128xf32>
    %c0_9 = arith.constant 0 : index
    %c0_10 = arith.constant 0 : index
    %12 = vector.load %arg4[%c0_9, %c0_10] : memref<128x128xf32, #tpu.memory_space<vmem>>, vector<128x128xf32>
    %cst_11 = arith.constant dense<0.000000e+00> : vector<8x128xf32>
    %13 = tpu.matmul %1, %12, %cst_11 {dimension_numbers = #tpu.dot_dimension_numbers<[1], [0], [0], [1], [0, 0, 1, 1], [], []>} : vector<8x128xf32>, vector<128x128xf32>, vector<8x128xf32> -> vector<8x128xf32>
    %c0_12 = arith.constant 0 : index
    %c0_13 = arith.constant 0 : index
    %14 = vector.load %arg6[%c0_12, %c0_13] : memref<1x128xf32, #tpu.memory_space<vmem>>, vector<1x128xf32>
    %15 = vector.broadcast %14 : vector<1x128xf32> to vector<8x128xf32>
    %16 = arith.addf %13, %15 : vector<8x128xf32>
    %17 = vector.shape_cast %11 : vector<64x128xf32> to vector<8x8x128xf32>
    %18 = vector.shape_cast %16 : vector<8x128xf32> to vector<8x1x128xf32>
    %19 = vector.broadcast %18 : vector<8x1x128xf32> to vector<8x8x128xf32>
    %20 = arith.addf %17, %19 : vector<8x8x128xf32>
    %cst_14 = arith.constant 5.000000e-01 : f32
    %21 = vector.broadcast %cst_14 : f32 to vector<8x8x128xf32>
    %22 = arith.mulf %21, %20 : vector<8x8x128xf32>
    %cst_15 = arith.constant 0.707106769 : f32
    %23 = vector.broadcast %cst_15 : f32 to vector<8x8x128xf32>
    %24 = arith.mulf %20, %23 : vector<8x8x128xf32>
    %25 = math.erf %24 : vector<8x8x128xf32>
    %cst_16 = arith.constant 1.000000e+00 : f32
    %26 = vector.broadcast %cst_16 : f32 to vector<8x8x128xf32>
    %27 = arith.addf %26, %25 : vector<8x8x128xf32>
    %28 = arith.mulf %22, %27 : vector<8x8x128xf32>
    %c0_17 = arith.constant 0 : index
    %c0_18 = arith.constant 0 : index
    %29 = vector.load %arg7[%c0_17, %c0_18] : memref<1x128xf32, #tpu.memory_space<vmem>>, vector<1x128xf32>
    %30 = vector.shape_cast %29 : vector<1x128xf32> to vector<1x1x128xf32>
    %31 = vector.broadcast %30 : vector<1x1x128xf32> to vector<8x8x128xf32>
    %32 = arith.mulf %28, %31 : vector<8x8x128xf32>
    %cst_19 = arith.constant dense<0.000000e+00> : vector<8x8xf32>
    %33 = vector.multi_reduction <add>, %32, %cst_19 [2] : vector<8x8x128xf32> to vector<8x8xf32>
    %34 = vector.shape_cast %33 : vector<8x8xf32> to vector<8x8x1xf32>
    %c0_20 = arith.constant 0 : index
    %c0_21 = arith.constant 0 : index
    %35 = memref.load %arg8[%c0_20, %c0_21] : memref<1x1xf32, #tpu.memory_space<smem>>
    %36 = vector.broadcast %35 : f32 to vector<8x8x1xf32>
    %37 = arith.addf %34, %36 : vector<8x8x1xf32>
    %38 = vector.broadcast %37 : vector<8x8x1xf32> to vector<8x8x128xf32>
    %39 = arith.mulf %38, %0 : vector<8x8x128xf32>
    %cst_22 = arith.constant dense<0.000000e+00> : vector<8x128xf32>
    %40 = vector.multi_reduction <add>, %39, %cst_22 [1] : vector<8x8x128xf32> to vector<8x128xf32>
    %c0_23 = arith.constant 0 : index
    %c0_24 = arith.constant 0 : index
    %41 = vector.load %arg9[%c0_23, %c0_24] : memref<8x128xf32, #tpu.memory_space<vmem>>, vector<8x128xf32>
    tpu.vector_store %arg9[%c0_23, %c0_24], %40 {strides = array<i32>} : memref<8x128xf32, #tpu.memory_space<vmem>>, vector<8x128xf32>,
    return
  }
  func.func @transform_0(%arg0: i32) -> (i32, i32, i32) {
    %c0_i32 = arith.constant 0 : i32
    %c0_i32_0 = arith.constant 0 : i32
    %c0_i32_1 = arith.constant 0 : i32
    return %arg0, %c0_i32, %c0_i32_0 : i32, i32, i32
  }
  func.func @transform_1(%arg0: i32) -> (i32, i32) {
    %c0_i32 = arith.constant 0 : i32
    %c0_i32_0 = arith.constant 0 : i32
    return %arg0, %c0_i32 : i32, i32
  }
  func.func @transform_2(%arg0: i32) -> (i32, i32) {
    %c0_i32 = arith.constant 0 : i32
    %c0_i32_0 = arith.constant 0 : i32
    %c0_i32_1 = arith.constant 0 : i32
    return %c0_i32, %c0_i32_0 : i32, i32
  }
  func.func @transform_3(%arg0: i32) -> (i32, i32) {
    %c0_i32 = arith.constant 0 : i32
    %c0_i32_0 = arith.constant 0 : i32
    %c0_i32_1 = arith.constant 0 : i32
    return %c0_i32, %c0_i32_0 : i32, i32
  }
  func.func @transform_4(%arg0: i32) -> (i32, i32) {
    %c0_i32 = arith.constant 0 : i32
    %c0_i32_0 = arith.constant 0 : i32
    %c0_i32_1 = arith.constant 0 : i32
    return %c0_i32, %c0_i32_0 : i32, i32
  }
  func.func @transform_5(%arg0: i32) -> (i32, i32) {
    %c0_i32 = arith.constant 0 : i32
    %c0_i32_0 = arith.constant 0 : i32
    %c0_i32_1 = arith.constant 0 : i32
    return %c0_i32, %c0_i32_0 : i32, i32
  }
  func.func @transform_6(%arg0: i32) -> (i32, i32) {
    %c0_i32 = arith.constant 0 : i32
    %c0_i32_0 = arith.constant 0 : i32
    %c0_i32_1 = arith.constant 0 : i32
    return %c0_i32, %c0_i32_0 : i32, i32
  }
  func.func @transform_7(%arg0: i32) -> (i32, i32) {
    %c0_i32 = arith.constant 0 : i32
    %c0_i32_0 = arith.constant 0 : i32
    %c0_i32_1 = arith.constant 0 : i32
    return %c0_i32, %c0_i32_0 : i32, i32
  }
  func.func @transform_8(%arg0: i32) -> (i32, i32) {
    %c0_i32 = arith.constant 0 : i32
    %c0_i32_0 = arith.constant 0 : i32
    return %arg0, %c0_i32 : i32, i32
  }
}

</mosaic_0001>

<llo_original>
// kernel: tpu_custom_call.1
$region0: #{tpu_custom_call.1}
  #allocation0 [shape = 'u32[]', space=smem, size = 0x4, offset = 0x4, fixed_abs, tag = 'smem constant byte address 0x4 - core index']
  #allocation1 [shape = 'u32[144,128]{1,0:T(1,128)}', space=vmem, size = 0x12000, scoped, tag = 'internal scratch']
  #allocation2 [shape = 'f32[1,1]{1,0:T(1,128)S(6)}', space=smem, size = 0x200, scoped, tag = 'scoped memory for tpu_custom_call.1']
  %s0 = inlined_call_operand.hbm [shape: f32[16,8,128], index: 0, kind: input, shape index: {}]
  %s1 = inlined_call_operand.hbm [shape: f32[16,128], index: 1, kind: input, shape index: {}]
  %s2 = inlined_call_operand.hbm [shape: f32[128,128], index: 2, kind: input, shape index: {}]
  %s3 = inlined_call_operand.hbm [shape: f32[128,128], index: 3, kind: input, shape index: {}]
  %s4 = inlined_call_operand.hbm [shape: f32[128,128], index: 4, kind: input, shape index: {}]
  %s5 = inlined_call_operand.vmem [shape: f32[1,128], index: 5, kind: input, shape index: {}]
  %s6 = inlined_call_operand.vmem [shape: f32[1,128], index: 6, kind: input, shape index: {}]
  %s7 = inlined_call_operand.<no memory space> [shape: f32[1,1], index: 7, kind: input, shape index: {}]
  %s8 = inlined_call_operand.hbm [shape: f32[16,128], index: 8, kind: output, shape index: {}]
  %s9 = sld [smem:[#allocation0]]
  $region85: #{tpu_custom_call.1} parent=0
    _
  %s11 = ssub.s32 1, %s9
  %s12 = scalar_select 0, %s11, %s9
  %13 = sst [smem:[#allocation2]] %s7
  $region1: #{tpu_custom_call.1} parent=0
    #allocation3 [shape = 'u8[65536]{0}', space=vmem, size = 0x10000, scoped, tag = 'input window, operand 0']
    #allocation4 [shape = 's32[2]{0}', space=sflag, size = 0x8, scoped, tag = 'scoped memory for tpu_custom_call.1']
    #allocation5 [shape = 's32[2]{0}', space=sflag, size = 0x8, scoped, tag = 'scoped memory for tpu_custom_call.1']
    #allocation6 [shape = 'u8[8192]{0}', space=vmem, size = 0x2000, scoped, tag = 'input window, operand 1']
    #allocation7 [shape = 's32[2]{0}', space=sflag, size = 0x8, scoped, tag = 'scoped memory for tpu_custom_call.1']
    #allocation8 [shape = 'u8[65536]{0}', space=vmem, size = 0x10000, scoped, tag = 'input window, operand 2, single buffered']
    #allocation9 [shape = 'u8[65536]{0}', space=vmem, size = 0x10000, scoped, tag = 'input window, operand 3, single buffered']
    #allocation10 [shape = 's32[1]{0}', space=sflag, size = 0x4, scoped, tag = 'scoped memory for tpu_custom_call.1']
    #allocation11 [shape = 'u8[65536]{0}', space=vmem, size = 0x10000, scoped, tag = 'input window, operand 4, single buffered']
    #allocation12 [shape = 'u8[8192]{0}', space=vmem, size = 0x2000, scoped, tag = 'output window, operand 0']
    %14 = vsyncpa [#allocation4], 0
    %s15 = scalar_lea.sflag [#allocation4], 1
    %16 = vsyncpa %s15, 0
    %17 = vsyncpa [#allocation7], 0
    %s18 = scalar_lea.sflag [#allocation7], 1
    %19 = vsyncpa %s18, 0
    %20 = vsyncpa [#allocation10], 0
    %21 = vsyncpa [#allocation5], 0
    %s22 = scalar_lea.sflag [#allocation5], 1
    %23 = vsyncpa %s22, 0
    loop: start=0, step=1, limit=4
    $region2: #{tpu_custom_call.1} parent=1 // loop_pre_header
      _
    $region3: #{tpu_custom_call.1} parent=1 // loop_header
      %s25 = sphi 0, %s29
      %p26 = scmp.ge.s32.totalorder %s25, 4
      %s35 = sphi 0, %s37
      %s38 = sphi 0, %s35
      %s39 = sphi 0, %s38
      %s55 = sphi 0, %s39
      %s61 = sphi 0, %s63
      %s64 = sphi 0, %s61
      %s65 = sphi 0, %s64
      %s81 = sphi 0, %s65
      %s85 = sphi 0, %s85
      %s87 = sphi 0, %s85
      %s88 = sphi 0, %s87
      %s102 = sphi 0, %s88
      %s106 = sphi 0, %s106
      %s108 = sphi 0, %s106
      %s109 = sphi 0, %s108
      %s123 = sphi 0, %s109
      %s127 = sphi 0, %s127
      %s129 = sphi 0, %s127
      %s130 = sphi 0, %s129
      %s144 = sphi 0, %s130
      %s148 = sphi 0, %s148
      %s150 = sphi 0, %s148
      %s151 = sphi 0, %s150
      %s165 = sphi 0, %s151
      %s169 = sphi 0, %s169
      %s171 = sphi 0, %s169
      %s172 = sphi 0, %s171
      %s186 = sphi 0, %s172
      %s190 = sphi 0, %s190
      %s192 = sphi 0, %s190
      %s193 = sphi 0, %s192
      %s207 = sphi 0, %s193
      %s213 = sphi 0, %s215
      %s216 = sphi 0, %s213
      %s217 = sphi 0, %s216
      %s233 = sphi 0, %s217
    $region4: #{tpu_custom_call.1} parent=1 // loop_header_branch
      %28 = sbr.rel (%p26) target = $region8
    $region5: #{tpu_custom_call.1} parent=1 // loop_body
      %s30 = ssub.s32 %s25, 1
      %s31 = ssub.s32 %s25, 2
      %s32 = sadd.s32 %s25, 1
      %s33 = ssub.s32 %s25, %s32
      %p34 = scmp.eq.s32.totalorder %s33, 0
      %s36 = sadd.s32 %s35, 1
      %s37 = scalar_select %p34, %s35, %s36
      %p40 = pneg %p34
      %p41 = scmp.eq.s32.totalorder %s25, 1
      %p42 = por %p40, %p41
      %p43 = scmp.ne.s32.totalorder %s35, %s38
      %p44 = scmp.eq.s32.totalorder %s25, 0
      %p45 = por %p43, %p44
      %p46 = scmp.ne.s32.totalorder %s35, %s38
      %p47 = scmp.eq.s32.totalorder %s30, 1
      %p48 = por %p46, %p47
      %p49 = scmp.ne.s32.totalorder %s38, %s39
      %p50 = scmp.eq.s32.totalorder %s30, 0
      %p51 = por %p49, %p50
      %p52 = scmp.ne.s32.totalorder %s38, %s39
      %p53 = scmp.eq.s32.totalorder %s31, 1
      %p54 = por %p52, %p53
      %p56 = scmp.ne.s32.totalorder %s39, %s55
      %p57 = scmp.eq.s32.totalorder %s31, 0
      %p58 = por %p56, %p57
      %s59 = ssub.s32 %s25, %s32
      %p60 = scmp.eq.s32.totalorder %s59, 0
      %s62 = sadd.s32 %s61, 1
      %s63 = scalar_select %p60, %s61, %s62
      %p66 = pneg %p60
      %p67 = scmp.eq.s32.totalorder %s25, 1
      %p68 = por %p66, %p67
      %p69 = scmp.ne.s32.totalorder %s61, %s64
      %p70 = scmp.eq.s32.totalorder %s25, 0
      %p71 = por %p69, %p70
      %p72 = scmp.ne.s32.totalorder %s61, %s64
      %p73 = scmp.eq.s32.totalorder %s30, 1
      %p74 = por %p72, %p73
      %p75 = scmp.ne.s32.totalorder %s64, %s65
      %p76 = scmp.eq.s32.totalorder %s30, 0
      %p77 = por %p75, %p76
      %p78 = scmp.ne.s32.totalorder %s64, %s65
      %p79 = scmp.eq.s32.totalorder %s31, 1
      %p80 = por %p78, %p79
      %p82 = scmp.ne.s32.totalorder %s65, %s81
      %p83 = scmp.eq.s32.totalorder %s31, 0
      %p84 = por %p82, %p83
      %s86 = sadd.s32 %s85, 1
      %p89 = scmp.eq.s32.totalorder %s25, 1
      %p90 = scmp.ne.s32.totalorder %s85, %s87
      %p91 = scmp.eq.s32.totalorder %s25, 0
      %p92 = por %p90, %p91
      %p93 = scmp.ne.s32.totalorder %s85, %s87
      %p94 = scmp.eq.s32.totalorder %s30, 1
      %p95 = por %p93, %p94
      %p96 = scmp.ne.s32.totalorder %s87, %s88
      %p97 = scmp.eq.s32.totalorder %s30, 0
      %p98 = por %p96, %p97
      %p99 = scmp.ne.s32.totalorder %s87, %s88
      %p100 = scmp.eq.s32.totalorder %s31, 1
      %p101 = por %p99, %p100
      %p103 = scmp.ne.s32.totalorder %s88, %s102
      %p104 = scmp.eq.s32.totalorder %s31, 0
      %p105 = por %p103, %p104
      %s107 = sadd.s32 %s106, 1
      %p110 = scmp.eq.s32.totalorder %s25, 1
      %p111 = scmp.ne.s32.totalorder %s106, %s108
      %p112 = scmp.eq.s32.totalorder %s25, 0
      %p113 = por %p111, %p112
      %p114 = scmp.ne.s32.totalorder %s106, %s108
      %p115 = scmp.eq.s32.totalorder %s30, 1
      %p116 = por %p114, %p115
      %p117 = scmp.ne.s32.totalorder %s108, %s109
      %p118 = scmp.eq.s32.totalorder %s30, 0
      %p119 = por %p117, %p118
      %p120 = scmp.ne.s32.totalorder %s108, %s109
      %p121 = scmp.eq.s32.totalorder %s31, 1
      %p122 = por %p120, %p121
      %p124 = scmp.ne.s32.totalorder %s109, %s123
      %p125 = scmp.eq.s32.totalorder %s31, 0
      %p126 = por %p124, %p125
      %s128 = sadd.s32 %s127, 1
      %p131 = scmp.eq.s32.totalorder %s25, 1
      %p132 = scmp.ne.s32.totalorder %s127, %s129
      %p133 = scmp.eq.s32.totalorder %s25, 0
      %p134 = por %p132, %p133
      %p135 = scmp.ne.s32.totalorder %s127, %s129
      %p136 = scmp.eq.s32.totalorder %s30, 1
      %p137 = por %p135, %p136
      %p138 = scmp.ne.s32.totalorder %s129, %s130
      %p139 = scmp.eq.s32.totalorder %s30, 0
      %p140 = por %p138, %p139
      %p141 = scmp.ne.s32.totalorder %s129, %s130
      %p142 = scmp.eq.s32.totalorder %s31, 1
      %p143 = por %p141, %p142
      %p145 = scmp.ne.s32.totalorder %s130, %s144
      %p146 = scmp.eq.s32.totalorder %s31, 0
      %p147 = por %p145, %p146
      %s149 = sadd.s32 %s148, 1
      %p152 = scmp.eq.s32.totalorder %s25, 1
      %p153 = scmp.ne.s32.totalorder %s148, %s150
      %p154 = scmp.eq.s32.totalorder %s25, 0
      %p155 = por %p153, %p154
      %p156 = scmp.ne.s32.totalorder %s148, %s150
      %p157 = scmp.eq.s32.totalorder %s30, 1
      %p158 = por %p156, %p157
      %p159 = scmp.ne.s32.totalorder %s150, %s151
      %p160 = scmp.eq.s32.totalorder %s30, 0
      %p161 = por %p159, %p160
      %p162 = scmp.ne.s32.totalorder %s150, %s151
      %p163 = scmp.eq.s32.totalorder %s31, 1
      %p164 = por %p162, %p163
      %p166 = scmp.ne.s32.totalorder %s151, %s165
      %p167 = scmp.eq.s32.totalorder %s31, 0
      %p168 = por %p166, %p167
      %s170 = sadd.s32 %s169, 1
      %p173 = scmp.eq.s32.totalorder %s25, 1
      %p174 = scmp.ne.s32.totalorder %s169, %s171
      %p175 = scmp.eq.s32.totalorder %s25, 0
      %p176 = por %p174, %p175
      %p177 = scmp.ne.s32.totalorder %s169, %s171
      %p178 = scmp.eq.s32.totalorder %s30, 1
      %p179 = por %p177, %p178
      %p180 = scmp.ne.s32.totalorder %s171, %s172
      %p181 = scmp.eq.s32.totalorder %s30, 0
      %p182 = por %p180, %p181
      %p183 = scmp.ne.s32.totalorder %s171, %s172
      %p184 = scmp.eq.s32.totalorder %s31, 1
      %p185 = por %p183, %p184
      %p187 = scmp.ne.s32.totalorder %s172, %s186
      %p188 = scmp.eq.s32.totalorder %s31, 0
      %p189 = por %p187, %p188
      %s191 = sadd.s32 %s190, 1
      %p194 = scmp.eq.s32.totalorder %s25, 1
      %p195 = scmp.ne.s32.totalorder %s190, %s192
      %p196 = scmp.eq.s32.totalorder %s25, 0
      %p197 = por %p195, %p196
      %p198 = scmp.ne.s32.totalorder %s190, %s192
      %p199 = scmp.eq.s32.totalorder %s30, 1
      %p200 = por %p198, %p199
      %p201 = scmp.ne.s32.totalorder %s192, %s193
      %p202 = scmp.eq.s32.totalorder %s30, 0
      %p203 = por %p201, %p202
      %p204 = scmp.ne.s32.totalorder %s192, %s193
      %p205 = scmp.eq.s32.totalorder %s31, 1
      %p206 = por %p204, %p205
      %p208 = scmp.ne.s32.totalorder %s193, %s207
      %p209 = scmp.eq.s32.totalorder %s31, 0
      %p210 = por %p208, %p209
      %s211 = ssub.s32 %s25, %s32
      %p212 = scmp.eq.s32.totalorder %s211, 0
      %s214 = sadd.s32 %s213, 1
      %s215 = scalar_select %p212, %s213, %s214
      %p218 = pneg %p212
      %p219 = scmp.eq.s32.totalorder %s25, 1
      %p220 = por %p218, %p219
      %p221 = scmp.ne.s32.totalorder %s213, %s216
      %p222 = scmp.eq.s32.totalorder %s25, 0
      %p223 = por %p221, %p222
      %p224 = scmp.ne.s32.totalorder %s213, %s216
      %p225 = scmp.eq.s32.totalorder %s30, 1
      %p226 = por %p224, %p225
      %p227 = scmp.ne.s32.totalorder %s216, %s217
      %p228 = scmp.eq.s32.totalorder %s30, 0
      %p229 = por %p227, %p228
      %p230 = scmp.ne.s32.totalorder %s216, %s217
      %p231 = scmp.eq.s32.totalorder %s31, 1
      %p232 = por %p230, %p231
      %p234 = scmp.ne.s32.totalorder %s217, %s233
      %p235 = scmp.eq.s32.totalorder %s31, 0
      %p236 = por %p234, %p235
      %p237 = scmp.le.s32.totalorder 1, %s25
      %p238 = scmp.lt.s32.totalorder %s25, 3
      %p239 = pnand %p237, %p238
      %p240 = pneg %p239
      // Predicated region
      $region9: #{tpu_custom_call.1} parent=5 // pred_check
        _
      $region10: #{tpu_custom_call.1} parent=5 // pred_check_branch
        %242 = sbr.rel (%p239) target = $region12
      $region11: #{tpu_custom_call.1} parent=5 // pred_region
        %s243 = ssub.s32 %s25, 1
        // Predicated region
        $region13: #{tpu_custom_call.1} parent=11 // pred_check
          %p244 = pneg %p98
        $region14: #{tpu_custom_call.1} parent=11 // pred_check_branch
          %246 = sbr.rel (%p244) target = $region16
        $region15: #{tpu_custom_call.1} parent=11 // pred_region
          %s248 = ssub.s32 2048, 2048
          %249 = vsyncadd [#allocation7], %s248
          %s250 = sshll.u32 [#allocation8], 4
          %s251 = int_to_ptr.vmem [resolvable:$true] %s250
          %256 = dma.hbm_to_vmem [thread:$0]  %s2, 2048, %s251, [#allocation7], 128, 128, 8
        $region16: #{tpu_custom_call.1} parent=11 // pred_fallthru
          _
        // Predicated region
        $region17: #{tpu_custom_call.1} parent=11 // pred_check
          %p257 = pneg %p119
        $region18: #{tpu_custom_call.1} parent=11 // pred_check_branch
          %259 = sbr.rel (%p257) target = $region20
        $region19: #{tpu_custom_call.1} parent=11 // pred_region
          %s261 = ssub.s32 2048, 2048
          %262 = vsyncadd [#allocation10], %s261
          %s263 = sshll.u32 [#allocation9], 4
          %s264 = int_to_ptr.vmem [resolvable:$true] %s263
          %269 = dma.hbm_to_vmem [thread:$0]  %s3, 2048, %s264, [#allocation10], 128, 128, 8
        $region20: #{tpu_custom_call.1} parent=11 // pred_fallthru
          _
        // Predicated region
        $region21: #{tpu_custom_call.1} parent=11 // pred_check
          %p270 = pneg %p140
        $region22: #{tpu_custom_call.1} parent=11 // pred_check_branch
          %272 = sbr.rel (%p270) target = $region24
        $region23: #{tpu_custom_call.1} parent=11 // pred_region
          %s274 = ssub.s32 2048, 2048
          %275 = vsyncadd [#allocation10], %s274
          %s276 = sshll.u32 [#allocation11], 4
          %s277 = int_to_ptr.vmem [resolvable:$true] %s276
          %282 = dma.hbm_to_vmem [thread:$0]  %s4, 2048, %s277, [#allocation10], 128, 128, 8
        $region24: #{tpu_custom_call.1} parent=11 // pred_fallthru
          _
        // Predicated region
        $region25: #{tpu_custom_call.1} parent=11 // pred_check
          %p283 = pneg %p161
        $region26: #{tpu_custom_call.1} parent=11 // pred_check_branch
          %285 = sbr.rel (%p283) target = $region28
        $region27: #{tpu_custom_call.1} parent=11 // pred_region
          _
        $region28: #{tpu_custom_call.1} parent=11 // pred_fallthru
          _
        // Predicated region
        $region29: #{tpu_custom_call.1} parent=11 // pred_check
          %p286 = pneg %p182
        $region30: #{tpu_custom_call.1} parent=11 // pred_check_branch
          %288 = sbr.rel (%p286) target = $region32
        $region31: #{tpu_custom_call.1} parent=11 // pred_region
          _
        $region32: #{tpu_custom_call.1} parent=11 // pred_fallthru
          _
        // Predicated region
        $region33: #{tpu_custom_call.1} parent=11 // pred_check
          %p289 = pneg %p203
        $region34: #{tpu_custom_call.1} parent=11 // pred_check_branch
          %291 = sbr.rel (%p289) target = $region36
        $region35: #{tpu_custom_call.1} parent=11 // pred_region
          _
        $region36: #{tpu_custom_call.1} parent=11 // pred_fallthru
          _
      $region12: #{tpu_custom_call.1} parent=5 // pred_fallthru
        _
      %p292 = scmp.lt.s32.totalorder %s25, 2
      // Predicated region
      $region37: #{tpu_custom_call.1} parent=5 // pred_check
        %p293 = pneg %p292
      $region38: #{tpu_custom_call.1} parent=5 // pred_check_branch
        %295 = sbr.rel (%p293) target = $region40
      $region39: #{tpu_custom_call.1} parent=5 // pred_region
        // Predicated region
        $region41: #{tpu_custom_call.1} parent=39 // pred_check
          %p296 = pneg %p45
        $region42: #{tpu_custom_call.1} parent=39 // pred_check_branch
          %298 = sbr.rel (%p296) target = $region44
        $region43: #{tpu_custom_call.1} parent=39 // pred_region
          %s299 = sand.u32 %s35, 1
          %s300 = scalar_lea.sflag [#allocation4], %s299
          %s301 = sand.u32 %s35, 1
          %s302 = smul.addr %s301, 64
          %s303 = scalar_lea.vmem [#allocation3], %s302
          %s304 = smul.u32 8, %s25
          %s306 = ssub.s32 1024, 1024
          %307 = vsyncadd %s300, %s306
          %s308 = smul.addr %s304, 128
          %s309 = scalar_lea.hbm %s0, %s308
          %s310 = sshll.u32 %s303, 4
          %s311 = int_to_ptr.vmem [resolvable:$true] %s310
          %316 = dma.hbm_to_vmem [thread:$0]  %s309, 1024, %s311, %s300, 128, 128, 8
        $region44: #{tpu_custom_call.1} parent=39 // pred_fallthru
          _
        // Predicated region
        $region45: #{tpu_custom_call.1} parent=39 // pred_check
          %p317 = pneg %p71
        $region46: #{tpu_custom_call.1} parent=39 // pred_check_branch
          %319 = sbr.rel (%p317) target = $region48
        $region47: #{tpu_custom_call.1} parent=39 // pred_region
          %s320 = sand.u32 %s25, 1
          %s321 = scalar_lea.sflag [#allocation7], %s320
          %s322 = sand.u32 %s61, 1
          %s323 = smul.addr %s322, 8
          %s324 = scalar_lea.vmem [#allocation6], %s323
          %s326 = ssub.s32 128, 128
          %327 = vsyncadd %s321, %s326
          %s328 = smul.addr %s25, 128
          %s329 = scalar_lea.hbm %s1, %s328
          %s331 = sshll.u32 %s324, 4
          %s332 = int_to_ptr.vmem [resolvable:$true] %s331
          %334 = dma.hbm_to_vmem [thread:$0]  %s329, 128, %s332, %s321
        $region48: #{tpu_custom_call.1} parent=39 // pred_fallthru
          _
      $region40: #{tpu_custom_call.1} parent=5 // pred_fallthru
        _
      %p335 = scmp.le.s32.totalorder 1, %s25
      %p336 = scmp.lt.s32.totalorder %s25, 3
      %p337 = pnand %p335, %p336
      %p338 = pneg %p337
      // Predicated region
      $region49: #{tpu_custom_call.1} parent=5 // pred_check
        _
      $region50: #{tpu_custom_call.1} parent=5 // pred_check_branch
        %340 = sbr.rel (%p337) target = $region52
      $region51: #{tpu_custom_call.1} parent=5 // pred_region
        %s341 = ssub.s32 %s25, 1
        %s342 = sand.u32 %s38, 1
        %s343 = scalar_lea.sflag [#allocation4], %s342
        %s344 = sand.u32 %s38, 1
        %s345 = smul.addr %s344, 64
        %s346 = scalar_lea.vmem [#allocation3], %s345
        // Predicated region
        $region53: #{tpu_custom_call.1} parent=51 // pred_check
          %p347 = pneg %p51
        $region54: #{tpu_custom_call.1} parent=51 // pred_check_branch
          %349 = sbr.rel (%p347) target = $region56
        $region55: #{tpu_custom_call.1} parent=51 // pred_region
          %350 = dma.done %s343, 1024
        $region56: #{tpu_custom_call.1} parent=51 // pred_fallthru
          _
        %s351 = sand.u32 %s30, 1
        %s352 = scalar_lea.sflag [#allocation7], %s351
        %s353 = sand.u32 %s64, 1
        %s354 = smul.addr %s353, 8
        %s355 = scalar_lea.vmem [#allocation6], %s354
        // Predicated region
        $region57: #{tpu_custom_call.1} parent=51 // pred_check
          %p356 = pneg %p77
        $region58: #{tpu_custom_call.1} parent=51 // pred_check_branch
          %358 = sbr.rel (%p356) target = $region60
        $region59: #{tpu_custom_call.1} parent=51 // pred_region
          %359 = dma.done %s352, 128
        $region60: #{tpu_custom_call.1} parent=51 // pred_fallthru
          _
        // Predicated region
        $region61: #{tpu_custom_call.1} parent=51 // pred_check
          %p360 = pneg %p98
        $region62: #{tpu_custom_call.1} parent=51 // pred_check_branch
          %362 = sbr.rel (%p360) target = $region64
        $region63: #{tpu_custom_call.1} parent=51 // pred_region
          %363 = dma.done [#allocation7], 2048
        $region64: #{tpu_custom_call.1} parent=51 // pred_fallthru
          _
        // Predicated region
        $region65: #{tpu_custom_call.1} parent=51 // pred_check
          %p364 = pneg %p119
        $region66: #{tpu_custom_call.1} parent=51 // pred_check_branch
          %366 = sbr.rel (%p364) target = $region68
        $region67: #{tpu_custom_call.1} parent=51 // pred_region
          %367 = dma.done [#allocation10], 2048
        $region68: #{tpu_custom_call.1} parent=51 // pred_fallthru
          _
        // Predicated region
        $region69: #{tpu_custom_call.1} parent=51 // pred_check
          %p368 = pneg %p140
        $region70: #{tpu_custom_call.1} parent=51 // pred_check_branch
          %370 = sbr.rel (%p368) target = $region72
        $region71: #{tpu_custom_call.1} parent=51 // pred_region
          %371 = dma.done [#allocation10], 2048
        $region72: #{tpu_custom_call.1} parent=51 // pred_fallthru
          _
        %s372 = sand.u32 %s38, 1
        %s373 = scalar_lea.sflag [#allocation4], %s372
        %s374 = sand.u32 %s38, 1
        %s375 = smul.addr %s374, 64
        %s376 = scalar_lea.vmem [#allocation3], %s375
        %p377 = pneg %p51
        %p378 = pneg %p48
        %s379 = sand.u32 %s30, 1
        %s380 = scalar_lea.sflag [#allocation7], %s379
        %s381 = sand.u32 %s64, 1
        %s382 = smul.addr %s381, 8
        %s383 = scalar_lea.vmem [#allocation6], %s382
        %p384 = pneg %p77
        %p385 = pneg %p74
        %p386 = pneg %p98
        %p387 = pneg %p95
        %p388 = pneg %p119
        %p389 = pneg %p116
        %p390 = pneg %p140
        %p391 = pneg %p137
        %p392 = pneg %p161
        %p393 = pneg %p158
        %p394 = pneg %p182
        %p395 = pneg %p179
        %p396 = pneg %p203
        %p397 = pneg %p200
        %p398 = pneg %p229
        %p399 = pneg %p226
        %s400 = sand.u32 %s216, 1
        %s401 = scalar_lea.sflag [#allocation5], %s400
        %s402 = sand.u32 %s216, 1
        %s403 = smul.addr %s402, 8
        %s404 = scalar_lea.vmem [#allocation12], %s403
        %s405 = smul.u32 8, %s30
        %v406 = vld [vmem:[%s346] sm:$0xff]
        %v407 = vld [vmem:[%s346 + $0x8] sm:$0xff]
        %v408 = vld [vmem:[%s346 + $0x10] sm:$0xff]
        %v409 = vld [vmem:[%s346 + $0x18] sm:$0xff]
        %v410 = vld [vmem:[%s346 + $0x20] sm:$0xff]
        %v411 = vld [vmem:[%s346 + $0x28] sm:$0xff]
        %v412 = vld [vmem:[%s346 + $0x30] sm:$0xff]
        %v413 = vld [vmem:[%s346 + $0x38] sm:$0xff]
        %v414 = vld [vmem:[%s355] sm:$0xff]
        %v416 = vcombine.high %v414, %v414
        %v418 = vunpack.c.l.s4 1966171168
        %v419 = vunpack.c.0.s8 %v418
        %v420 = vlaneseq
        %v421 = vshrl.u32 %v420, 7
        %v422 = vsub.s32 %v419, %v421
        %v423 = vrot.slane %v414, %v422
        %v425 = vunpack.c.l.s4 1966171168
        %v426 = vunpack.c.0.s8 %v425
        %v427 = vlaneseq
        %v428 = vshrl.u32 %v427, 7
        %v429 = vsub.s32 %v426, %v428
        %v430 = vrot.slane %v416, %v429
        %v431 = vcombine.high %v423, %v423
        %v432 = vcombine.high %v430, %v430
        %v434 = vunpack.c.l.s4 1966171168
        %v435 = vunpack.c.0.s8 %v434
        %v436 = vlaneseq
        %v437 = vshrl.u32 %v436, 7
        %v438 = vsub.s32 %v435, %v437
        %v439 = vrot.slane %v423, %v438
        %v441 = vunpack.c.l.s4 1966171168
        %v442 = vunpack.c.0.s8 %v441
        %v443 = vlaneseq
        %v444 = vshrl.u32 %v443, 7
        %v445 = vsub.s32 %v442, %v444
        %v446 = vrot.slane %v430, %v445
        %v448 = vunpack.c.l.s4 1966171168
        %v449 = vunpack.c.0.s8 %v448
        %v450 = vlaneseq
        %v451 = vshrl.u32 %v450, 7
        %v452 = vsub.s32 %v449, %v451
        %v453 = vrot.slane %v431, %v452
        %v455 = vunpack.c.l.s4 1966171168
        %v456 = vunpack.c.0.s8 %v455
        %v457 = vlaneseq
        %v458 = vshrl.u32 %v457, 7
        %v459 = vsub.s32 %v456, %v458
        %v460 = vrot.slane %v432, %v459
        %v461 = vcombine.high %v439, %v439
        %v462 = vcombine.high %v446, %v446
        %v463 = vcombine.high %v453, %v453
        %v464 = vcombine.high %v460, %v460
        %v465 = vlaneseq
        %v466 = vshrl.u32 %v465, 7
        %v467 = vsub.s32 0, %v466
        %v468 = vrot.slane %v439, %v467
        %v469 = vlaneseq
        %v470 = vshrl.u32 %v469, 7
        %v471 = vsub.s32 0, %v470
        %v472 = vrot.slane %v453, %v471
        %v473 = vlaneseq
        %v474 = vshrl.u32 %v473, 7
        %v475 = vsub.s32 0, %v474
        %v476 = vrot.slane %v461, %v475
        %v477 = vlaneseq
        %v478 = vshrl.u32 %v477, 7
        %v479 = vsub.s32 0, %v478
        %v480 = vrot.slane %v463, %v479
        %v481 = vlaneseq
        %v482 = vshrl.u32 %v481, 7
        %v483 = vsub.s32 0, %v482
        %v484 = vrot.slane %v446, %v483
        %v485 = vlaneseq
        %v486 = vshrl.u32 %v485, 7
        %v487 = vsub.s32 0, %v486
        %v488 = vrot.slane %v460, %v487
        %v489 = vlaneseq
        %v490 = vshrl.u32 %v489, 7
        %v491 = vsub.s32 0, %v490
        %v492 = vrot.slane %v462, %v491
        %v493 = vlaneseq
        %v494 = vshrl.u32 %v493, 7
        %v495 = vsub.s32 0, %v494
        %v496 = vrot.slane %v464, %v495
        %v505 = vmul.f32 %v468, %v406
        %v506 = vmul.f32 %v472, %v407
        %v507 = vmul.f32 %v476, %v408
        %v508 = vmul.f32 %v480, %v409
        %v509 = vmul.f32 %v484, %v410
        %v510 = vmul.f32 %v488, %v411
        %v511 = vmul.f32 %v492, %v412
        %v512 = vmul.f32 %v496, %v413
        %v513 = vld [vmem:[#allocation8] sm:$0xff]
        %v514 = vld [vmem:[#allocation8 + $0x8] sm:$0xff]
        %v515 = vld [vmem:[#allocation8 + $0x10] sm:$0xff]
        %v516 = vld [vmem:[#allocation8 + $0x18] sm:$0xff]
        %v517 = vld [vmem:[#allocation8 + $0x20] sm:$0xff]
        %v518 = vld [vmem:[#allocation8 + $0x28] sm:$0xff]
        %v519 = vld [vmem:[#allocation8 + $0x30] sm:$0xff]
        %v520 = vld [vmem:[#allocation8 + $0x38] sm:$0xff]
        %v521 = vld [vmem:[#allocation8 + $0x40] sm:$0xff]
        %v522 = vld [vmem:[#allocation8 + $0x48] sm:$0xff]
        %v523 = vld [vmem:[#allocation8 + $0x50] sm:$0xff]
        %v524 = vld [vmem:[#allocation8 + $0x58] sm:$0xff]
        %v525 = vld [vmem:[#allocation8 + $0x60] sm:$0xff]
        %v526 = vld [vmem:[#allocation8 + $0x68] sm:$0xff]
        %v527 = vld [vmem:[#allocation8 + $0x70] sm:$0xff]
        %v528 = vld [vmem:[#allocation8 + $0x78] sm:$0xff]
        %v529 = vld [vmem:[#allocation11] sm:$0xff]
        %v530 = vld [vmem:[#allocation11 + $0x8] sm:$0xff]
        %v531 = vld [vmem:[#allocation11 + $0x10] sm:$0xff]
        %v532 = vld [vmem:[#allocation11 + $0x18] sm:$0xff]
        %v533 = vld [vmem:[#allocation11 + $0x20] sm:$0xff]
        %v534 = vld [vmem:[#allocation11 + $0x28] sm:$0xff]
        %v535 = vld [vmem:[#allocation11 + $0x30] sm:$0xff]
        %v536 = vld [vmem:[#allocation11 + $0x38] sm:$0xff]
        %v537 = vld [vmem:[#allocation11 + $0x40] sm:$0xff]
        %v538 = vld [vmem:[#allocation11 + $0x48] sm:$0xff]
        %v539 = vld [vmem:[#allocation11 + $0x50] sm:$0xff]
        %v540 = vld [vmem:[#allocation11 + $0x58] sm:$0xff]
        %v541 = vld [vmem:[#allocation11 + $0x60] sm:$0xff]
        %v542 = vld [vmem:[#allocation11 + $0x68] sm:$0xff]
        %v543 = vld [vmem:[#allocation11 + $0x70] sm:$0xff]
        %v544 = vld [vmem:[#allocation11 + $0x78] sm:$0xff]
        %545 = vmatprep.subr.mxu0 0.0
        %546 = vmatpush1.msra.mxu0 %v529
        %547 = vmatprep.subr.mxu0 0.0
        %548 = vmatpush1.msra.mxu0 %v530
        %549 = vmatprep.subr.mxu0 0.0
        %550 = vmatpush1.msra.mxu0 %v531
        %551 = vmatprep.subr.mxu0 0.0
        %552 = vmatpush1.msra.mxu0 %v532
        %553 = vmatprep.subr.mxu0 0.0
        %554 = vmatpush1.msra.mxu0 %v533
        %555 = vmatprep.subr.mxu0 0.0
        %556 = vmatpush1.msra.mxu0 %v534
        %557 = vmatprep.subr.mxu0 0.0
        %558 = vmatpush1.msra.mxu0 %v535
        %559 = vmatprep.subr.mxu0 0.0
        %560 = vmatpush1.msra.mxu0 %v536
        %561 = vmatprep.subr.mxu0 0.0
        %562 = vmatpush1.msra.mxu0 %v537
        %563 = vmatprep.subr.mxu0 0.0
        %564 = vmatpush1.msra.mxu0 %v538
        %565 = vmatprep.subr.mxu0 0.0
        %566 = vmatpush1.msra.mxu0 %v539
        %567 = vmatprep.subr.mxu0 0.0
        %568 = vmatpush1.msra.mxu0 %v540
        %569 = vmatprep.subr.mxu0 0.0
        %570 = vmatpush1.msra.mxu0 %v541
        %571 = vmatprep.subr.mxu0 0.0
        %572 = vmatpush1.msra.mxu0 %v542
        %573 = vmatprep.subr.mxu0 0.0
        %574 = vmatpush1.msra.mxu0 %v543
        %575 = vmatprep.subr.mxu0 0.0
        %576 = vmatpush1.msra.mxu0 %v544
        %577 = vmatprep.subr.mxu0 0.0
        %578 = vmatpush1.msra.mxu0 0.0
        %579 = vmatprep.subr.mxu0 0.0
        %580 = vmatpush1.msra.mxu0 0.0
        %581 = vmatprep.subr.mxu0 0.0
        %582 = vmatpush1.msra.mxu0 0.0
        %583 = vmatprep.subr.mxu0 0.0
        %584 = vmatpush1.msra.mxu0 0.0
        %585 = vmatprep.subr.mxu0 0.0
        %586 = vmatpush1.msra.mxu0 0.0
        %587 = vmatprep.subr.mxu0 0.0
        %588 = vmatpush1.msra.mxu0 0.0
        %589 = vmatprep.subr.mxu0 0.0
        %590 = vmatpush1.msra.mxu0 0.0
        %591 = vmatprep.subr.mxu0 0.0
        %592 = vmatpush1.msra.mxu0 0.0
        %593 = vmatprep.subr.mxu0 0.0
        %594 = vmatpush1.msra.mxu0 0.0
        %595 = vmatprep.subr.mxu0 0.0
        %596 = vmatpush1.msra.mxu0 0.0
        %597 = vmatprep.subr.mxu0 0.0
        %598 = vmatpush1.msra.mxu0 0.0
        %599 = vmatprep.subr.mxu0 0.0
        %600 = vmatpush1.msra.mxu0 0.0
        %601 = vmatprep.subr.mxu0 0.0
        %602 = vmatpush1.msra.mxu0 0.0
        %603 = vmatprep.subr.mxu0 0.0
        %604 = vmatpush1.msra.mxu0 0.0
        %605 = vmatprep.subr.mxu0 0.0
        %606 = vmatpush1.msra.mxu0 0.0
        %607 = vmatprep.subr.mxu0 0.0
        %608 = vmatpush1.msra.mxu0 0.0
        %609 = vmatprep.mubr.f32.mxu0 0.0
        %610 = vmatmul.mubr.f32.gmra.mrb[0].mxu0 %v505
        %v611 = vpop.f32.mrb[0].mxu0
        %v612 = vadd.f32 0.0, %v611
        %v613 = vpop.f32.mrb[0].mxu0
        %614 = vmatprep.mubr.f32.mxu0 0.0
        %615 = vmatmul.mubr.f32.gmra.mrb[0].mxu0 %v506
        %v616 = vpop.f32.mrb[0].mxu0
        %v617 = vadd.f32 0.0, %v616
        %v618 = vpop.f32.mrb[0].mxu0
        %619 = vmatprep.mubr.f32.mxu0 0.0
        %620 = vmatmul.mubr.f32.gmra.mrb[0].mxu0 %v507
        %v621 = vpop.f32.mrb[0].mxu0
        %v622 = vadd.f32 0.0, %v621
        %v623 = vpop.f32.mrb[0].mxu0
        %624 = vmatprep.mubr.f32.mxu0 0.0
        %625 = vmatmul.mubr.f32.gmra.mrb[0].mxu0 %v508
        %v626 = vpop.f32.mrb[0].mxu0
        %v627 = vadd.f32 0.0, %v626
        %v628 = vpop.f32.mrb[0].mxu0
        %629 = vmatprep.mubr.f32.mxu0 0.0
        %630 = vmatmul.mubr.f32.gmra.mrb[0].mxu0 %v509
        %v631 = vpop.f32.mrb[0].mxu0
        %v632 = vadd.f32 0.0, %v631
        %v633 = vpop.f32.mrb[0].mxu0
        %634 = vmatprep.mubr.f32.mxu0 0.0
        %635 = vmatmul.mubr.f32.gmra.mrb[0].mxu0 %v510
        %v636 = vpop.f32.mrb[0].mxu0
        %v637 = vadd.f32 0.0, %v636
        %v638 = vpop.f32.mrb[0].mxu0
        %639 = vmatprep.mubr.f32.mxu0 0.0
        %640 = vmatmul.mubr.f32.gmra.mrb[0].mxu0 %v511
        %v641 = vpop.f32.mrb[0].mxu0
        %v642 = vadd.f32 0.0, %v641
        %v643 = vpop.f32.mrb[0].mxu0
        %644 = vmatprep.mubr.f32.mxu0 0.0
        %645 = vmatmul.mubr.f32.gmra.mrb[0].mxu0 %v512
        %v646 = vpop.f32.mrb[0].mxu0
        %v647 = vadd.f32 0.0, %v646
        %v648 = vpop.f32.mrb[0].mxu0
        %649 = vdwg.mxu0
        %650 = vmatprep.subr.mxu0 0.0
        %651 = vmatpush1.msra.mxu0 %v513
        %652 = vmatprep.subr.mxu0 0.0
        %653 = vmatpush1.msra.mxu0 %v514
        %654 = vmatprep.subr.mxu0 0.0
        %655 = vmatpush1.msra.mxu0 %v515
        %656 = vmatprep.subr.mxu0 0.0
        %657 = vmatpush1.msra.mxu0 %v516
        %658 = vmatprep.subr.mxu0 0.0
        %659 = vmatpush1.msra.mxu0 %v517
        %660 = vmatprep.subr.mxu0 0.0
        %661 = vmatpush1.msra.mxu0 %v518
        %662 = vmatprep.subr.mxu0 0.0
        %663 = vmatpush1.msra.mxu0 %v519
        %664 = vmatprep.subr.mxu0 0.0
        %665 = vmatpush1.msra.mxu0 %v520
        %666 = vmatprep.subr.mxu0 0.0
        %667 = vmatpush1.msra.mxu0 %v521
        %668 = vmatprep.subr.mxu0 0.0
        %669 = vmatpush1.msra.mxu0 %v522
        %670 = vmatprep.subr.mxu0 0.0
        %671 = vmatpush1.msra.mxu0 %v523
        %672 = vmatprep.subr.mxu0 0.0
        %673 = vmatpush1.msra.mxu0 %v524
        %674 = vmatprep.subr.mxu0 0.0
        %675 = vmatpush1.msra.mxu0 %v525
        %676 = vmatprep.subr.mxu0 0.0
        %677 = vmatpush1.msra.mxu0 %v526
        %678 = vmatprep.subr.mxu0 0.0
        %679 = vmatpush1.msra.mxu0 %v527
        %680 = vmatprep.subr.mxu0 0.0
        %681 = vmatpush1.msra.mxu0 %v528
        %682 = vmatprep.subr.mxu0 0.0
        %683 = vmatpush1.msra.mxu0 0.0
        %684 = vmatprep.subr.mxu0 0.0
        %685 = vmatpush1.msra.mxu0 0.0
        %686 = vmatprep.subr.mxu0 0.0
        %687 = vmatpush1.msra.mxu0 0.0
        %688 = vmatprep.subr.mxu0 0.0
        %689 = vmatpush1.msra.mxu0 0.0
        %690 = vmatprep.subr.mxu0 0.0
        %691 = vmatpush1.msra.mxu0 0.0
        %692 = vmatprep.subr.mxu0 0.0
        %693 = vmatpush1.msra.mxu0 0.0
        %694 = vmatprep.subr.mxu0 0.0
        %695 = vmatpush1.msra.mxu0 0.0
        %696 = vmatprep.subr.mxu0 0.0
        %697 = vmatpush1.msra.mxu0 0.0
        %698 = vmatprep.subr.mxu0 0.0
        %699 = vmatpush1.msra.mxu0 0.0
        %700 = vmatprep.subr.mxu0 0.0
        %701 = vmatpush1.msra.mxu0 0.0
        %702 = vmatprep.subr.mxu0 0.0
        %703 = vmatpush1.msra.mxu0 0.0
        %704 = vmatprep.subr.mxu0 0.0
        %705 = vmatpush1.msra.mxu0 0.0
        %706 = vmatprep.subr.mxu0 0.0
        %707 = vmatpush1.msra.mxu0 0.0
        %708 = vmatprep.subr.mxu0 0.0
        %709 = vmatpush1.msra.mxu0 0.0
        %710 = vmatprep.subr.mxu0 0.0
        %711 = vmatpush1.msra.mxu0 0.0
        %712 = vmatprep.subr.mxu0 0.0
        %713 = vmatpush1.msra.mxu0 0.0
        %714 = vmatprep.mubr.f32.mxu0 0.0
        %715 = vmatmul.mubr.f32.gmra.mrb[0].mxu0 %v406
        %v716 = vpop.f32.mrb[0].mxu0
        %v717 = vadd.f32 %v612, %v716
        %v718 = vpop.f32.mrb[0].mxu0
        %719 = vmatprep.mubr.f32.mxu0 0.0
        %720 = vmatmul.mubr.f32.gmra.mrb[0].mxu0 %v407
        %v721 = vpop.f32.mrb[0].mxu0
        %v722 = vadd.f32 %v617, %v721
        %v723 = vpop.f32.mrb[0].mxu0
        %724 = vmatprep.mubr.f32.mxu0 0.0
        %725 = vmatmul.mubr.f32.gmra.mrb[0].mxu0 %v408
        %v726 = vpop.f32.mrb[0].mxu0
        %v727 = vadd.f32 %v622, %v726
        %v728 = vpop.f32.mrb[0].mxu0
        %729 = vmatprep.mubr.f32.mxu0 0.0
        %730 = vmatmul.mubr.f32.gmra.mrb[0].mxu0 %v409
        %v731 = vpop.f32.mrb[0].mxu0
        %v732 = vadd.f32 %v627, %v731
        %v733 = vpop.f32.mrb[0].mxu0
        %734 = vmatprep.mubr.f32.mxu0 0.0
        %735 = vmatmul.mubr.f32.gmra.mrb[0].mxu0 %v410
        %v736 = vpop.f32.mrb[0].mxu0
        %v737 = vadd.f32 %v632, %v736
        %v738 = vpop.f32.mrb[0].mxu0
        %739 = vmatprep.mubr.f32.mxu0 0.0
        %740 = vmatmul.mubr.f32.gmra.mrb[0].mxu0 %v411
        %v741 = vpop.f32.mrb[0].mxu0
        %v742 = vadd.f32 %v637, %v741
        %v743 = vpop.f32.mrb[0].mxu0
        %744 = vmatprep.mubr.f32.mxu0 0.0
        %745 = vmatmul.mubr.f32.gmra.mrb[0].mxu0 %v412
        %v746 = vpop.f32.mrb[0].mxu0
        %v747 = vadd.f32 %v642, %v746
        %v748 = vpop.f32.mrb[0].mxu0
        %749 = vmatprep.mubr.f32.mxu0 0.0
        %750 = vmatmul.mubr.f32.gmra.mrb[0].mxu0 %v413
        %v751 = vpop.f32.mrb[0].mxu0
        %v752 = vadd.f32 %v647, %v751
        %v753 = vpop.f32.mrb[0].mxu0
        %754 = vdwg.mxu0
        %v755 = vld [vmem:[#allocation9] sm:$0xff]
        %v756 = vld [vmem:[#allocation9 + $0x8] sm:$0xff]
        %v757 = vld [vmem:[#allocation9 + $0x10] sm:$0xff]
        %v758 = vld [vmem:[#allocation9 + $0x18] sm:$0xff]
        %v759 = vld [vmem:[#allocation9 + $0x20] sm:$0xff]
        %v760 = vld [vmem:[#allocation9 + $0x28] sm:$0xff]
        %v761 = vld [vmem:[#allocation9 + $0x30] sm:$0xff]
        %v762 = vld [vmem:[#allocation9 + $0x38] sm:$0xff]
        %v763 = vld [vmem:[#allocation9 + $0x40] sm:$0xff]
        %v764 = vld [vmem:[#allocation9 + $0x48] sm:$0xff]
        %v765 = vld [vmem:[#allocation9 + $0x50] sm:$0xff]
        %v766 = vld [vmem:[#allocation9 + $0x58] sm:$0xff]
        %v767 = vld [vmem:[#allocation9 + $0x60] sm:$0xff]
        %v768 = vld [vmem:[#allocation9 + $0x68] sm:$0xff]
        %v769 = vld [vmem:[#allocation9 + $0x70] sm:$0xff]
        %v770 = vld [vmem:[#allocation9 + $0x78] sm:$0xff]
        %v771 = vld [vmem:[%s5] sm:$0x1]
        %v773 = vlaneseq
        %v774 = vshrl.u32 %v773, 7
        %v775 = vsub.s32 0, %v774
        %v776 = vrot.slane %v771, %v775
        %778 = vmatprep.subr.mxu0 0.0
        %779 = vmatpush1.msra.mxu0 %v755
        %780 = vmatprep.subr.mxu0 0.0
        %781 = vmatpush1.msra.mxu0 %v756
        %782 = vmatprep.subr.mxu0 0.0
        %783 = vmatpush1.msra.mxu0 %v757
        %784 = vmatprep.subr.mxu0 0.0
        %785 = vmatpush1.msra.mxu0 %v758
        %786 = vmatprep.subr.mxu0 0.0
        %787 = vmatpush1.msra.mxu0 %v759
        %788 = vmatprep.subr.mxu0 0.0
        %789 = vmatpush1.msra.mxu0 %v760
        %790 = vmatprep.subr.mxu0 0.0
        %791 = vmatpush1.msra.mxu0 %v761
        %792 = vmatprep.subr.mxu0 0.0
        %793 = vmatpush1.msra.mxu0 %v762
        %794 = vmatprep.subr.mxu0 0.0
        %795 = vmatpush1.msra.mxu0 %v763
        %796 = vmatprep.subr.mxu0 0.0
        %797 = vmatpush1.msra.mxu0 %v764
        %798 = vmatprep.subr.mxu0 0.0
        %799 = vmatpush1.msra.mxu0 %v765
        %800 = vmatprep.subr.mxu0 0.0
        %801 = vmatpush1.msra.mxu0 %v766
        %802 = vmatprep.subr.mxu0 0.0
        %803 = vmatpush1.msra.mxu0 %v767
        %804 = vmatprep.subr.mxu0 0.0
        %805 = vmatpush1.msra.mxu0 %v768
        %806 = vmatprep.subr.mxu0 0.0
        %807 = vmatpush1.msra.mxu0 %v769
        %808 = vmatprep.subr.mxu0 0.0
        %809 = vmatpush1.msra.mxu0 %v770
        %810 = vmatprep.subr.mxu0 0.0
        %811 = vmatpush1.msra.mxu0 0.0
        %812 = vmatprep.subr.mxu0 0.0
        %813 = vmatpush1.msra.mxu0 0.0
        %814 = vmatprep.subr.mxu0 0.0
        %815 = vmatpush1.msra.mxu0 0.0
        %816 = vmatprep.subr.mxu0 0.0
        %817 = vmatpush1.msra.mxu0 0.0
        %818 = vmatprep.subr.mxu0 0.0
        %819 = vmatpush1.msra.mxu0 0.0
        %820 = vmatprep.subr.mxu0 0.0
        %821 = vmatpush1.msra.mxu0 0.0
        %822 = vmatprep.subr.mxu0 0.0
        %823 = vmatpush1.msra.mxu0 0.0
        %824 = vmatprep.subr.mxu0 0.0
        %825 = vmatpush1.msra.mxu0 0.0
        %826 = vmatprep.subr.mxu0 0.0
        %827 = vmatpush1.msra.mxu0 0.0
        %828 = vmatprep.subr.mxu0 0.0
        %829 = vmatpush1.msra.mxu0 0.0
        %830 = vmatprep.subr.mxu0 0.0
        %831 = vmatpush1.msra.mxu0 0.0
        %832 = vmatprep.subr.mxu0 0.0
        %833 = vmatpush1.msra.mxu0 0.0
        %834 = vmatprep.subr.mxu0 0.0
        %835 = vmatpush1.msra.mxu0 0.0
        %836 = vmatprep.subr.mxu0 0.0
        %837 = vmatpush1.msra.mxu0 0.0
        %838 = vmatprep.subr.mxu0 0.0
        %839 = vmatpush1.msra.mxu0 0.0
        %840 = vmatprep.subr.mxu0 0.0
        %841 = vmatpush1.msra.mxu0 0.0
        %842 = vmatprep.mubr.f32.mxu0 0.0
        %843 = vmatmul.mubr.f32.gmra.mrb[0].mxu0 %v414
        %v844 = vpop.f32.mrb[0].mxu0
        %v845 = vadd.f32 %v776, %v844
        %v846 = vpop.f32.mrb[0].mxu0
        %847 = vdwg.mxu0
        %v849 = vcombine.high %v845, %v845
        %v851 = vunpack.c.l.s4 1966171168
        %v852 = vunpack.c.0.s8 %v851
        %v853 = vlaneseq
        %v854 = vshrl.u32 %v853, 7
        %v855 = vsub.s32 %v852, %v854
        %v856 = vrot.slane %v845, %v855
        %v858 = vunpack.c.l.s4 1966171168
        %v859 = vunpack.c.0.s8 %v858
        %v860 = vlaneseq
        %v861 = vshrl.u32 %v860, 7
        %v862 = vsub.s32 %v859, %v861
        %v863 = vrot.slane %v849, %v862
        %v864 = vcombine.high %v856, %v856
        %v865 = vcombine.high %v863, %v863
        %v867 = vunpack.c.l.s4 1966171168
        %v868 = vunpack.c.0.s8 %v867
        %v869 = vlaneseq
        %v870 = vshrl.u32 %v869, 7
        %v871 = vsub.s32 %v868, %v870
        %v872 = vrot.slane %v856, %v871
        %v874 = vunpack.c.l.s4 1966171168
        %v875 = vunpack.c.0.s8 %v874
        %v876 = vlaneseq
        %v877 = vshrl.u32 %v876, 7
        %v878 = vsub.s32 %v875, %v877
        %v879 = vrot.slane %v863, %v878
        %v881 = vunpack.c.l.s4 1966171168
        %v882 = vunpack.c.0.s8 %v881
        %v883 = vlaneseq
        %v884 = vshrl.u32 %v883, 7
        %v885 = vsub.s32 %v882, %v884
        %v886 = vrot.slane %v864, %v885
        %v888 = vunpack.c.l.s4 1966171168
        %v889 = vunpack.c.0.s8 %v888
        %v890 = vlaneseq
        %v891 = vshrl.u32 %v890, 7
        %v892 = vsub.s32 %v889, %v891
        %v893 = vrot.slane %v865, %v892
        %v894 = vcombine.high %v872, %v872
        %v895 = vcombine.high %v879, %v879
        %v896 = vcombine.high %v886, %v886
        %v897 = vcombine.high %v893, %v893
        %v898 = vlaneseq
        %v899 = vshrl.u32 %v898, 7
        %v900 = vsub.s32 0, %v899
        %v901 = vrot.slane %v872, %v900
        %v902 = vlaneseq
        %v903 = vshrl.u32 %v902, 7
        %v904 = vsub.s32 0, %v903
        %v905 = vrot.slane %v886, %v904
        %v906 = vlaneseq
        %v907 = vshrl.u32 %v906, 7
        %v908 = vsub.s32 0, %v907
        %v909 = vrot.slane %v894, %v908
        %v910 = vlaneseq
        %v911 = vshrl.u32 %v910, 7
        %v912 = vsub.s32 0, %v911
        %v913 = vrot.slane %v896, %v912
        %v914 = vlaneseq
        %v915 = vshrl.u32 %v914, 7
        %v916 = vsub.s32 0, %v915
        %v917 = vrot.slane %v879, %v916
        %v918 = vlaneseq
        %v919 = vshrl.u32 %v918, 7
        %v920 = vsub.s32 0, %v919
        %v921 = vrot.slane %v893, %v920
        %v922 = vlaneseq
        %v923 = vshrl.u32 %v922, 7
        %v924 = vsub.s32 0, %v923
        %v925 = vrot.slane %v895, %v924
        %v926 = vlaneseq
        %v927 = vshrl.u32 %v926, 7
        %v928 = vsub.s32 0, %v927
        %v929 = vrot.slane %v897, %v928
        %v938 = vadd.f32 %v717, %v901
        %v939 = vadd.f32 %v722, %v905
        %v940 = vadd.f32 %v727, %v909
        %v941 = vadd.f32 %v732, %v913
        %v942 = vadd.f32 %v737, %v917
        %v943 = vadd.f32 %v742, %v921
        %v944 = vadd.f32 %v747, %v925
        %v945 = vadd.f32 %v752, %v929
        %v946 = vmul.f32 %v938, 0.5
        %v947 = vmul.f32 %v939, 0.5
        %v948 = vmul.f32 %v940, 0.5
        %v949 = vmul.f32 %v941, 0.5
        %v950 = vmul.f32 %v942, 0.5
        %v951 = vmul.f32 %v943, 0.5
        %v952 = vmul.f32 %v944, 0.5
        %v953 = vmul.f32 %v945, 0.5
        %v954 = vmul.f32 %v938, 0.70710677
        %v955 = vmul.f32 %v939, 0.70710677
        %v956 = vmul.f32 %v940, 0.70710677
        %v957 = vmul.f32 %v941, 0.70710677
        %v958 = vmul.f32 %v942, 0.70710677
        %v959 = vmul.f32 %v943, 0.70710677
        %v960 = vmul.f32 %v944, 0.70710677
        %v961 = vmul.f32 %v945, 0.70710677
        %v962 = verf.f32.pop %v954
        %v963 = verf.f32.pop %v955
        %v964 = verf.f32.pop %v956
        %v965 = verf.f32.pop %v957
        %v966 = verf.f32.pop %v958
        %v967 = verf.f32.pop %v959
        %v968 = verf.f32.pop %v960
        %v969 = verf.f32.pop %v961
        %v970 = vadd.f32 %v962, 1.0
        %v971 = vadd.f32 %v963, 1.0
        %v972 = vadd.f32 %v964, 1.0
        %v973 = vadd.f32 %v965, 1.0
        %v974 = vadd.f32 %v966, 1.0
        %v975 = vadd.f32 %v967, 1.0
        %v976 = vadd.f32 %v968, 1.0
        %v977 = vadd.f32 %v969, 1.0
        %v978 = vmul.f32 %v946, %v970
        %v979 = vmul.f32 %v947, %v971
        %v980 = vmul.f32 %v948, %v972
        %v981 = vmul.f32 %v949, %v973
        %v982 = vmul.f32 %v950, %v974
        %v983 = vmul.f32 %v951, %v975
        %v984 = vmul.f32 %v952, %v976
        %v985 = vmul.f32 %v953, %v977
        %v986 = vld [vmem:[%s6] sm:$0x1]
        %v988 = vlaneseq
        %v989 = vshrl.u32 %v988, 7
        %v990 = vsub.s32 0, %v989
        %v991 = vrot.slane %v986, %v990
        %v993 = vmul.f32 %v978, %v991
        %v994 = vmul.f32 %v979, %v991
        %v995 = vmul.f32 %v980, %v991
        %v996 = vmul.f32 %v981, %v991
        %v997 = vmul.f32 %v982, %v991
        %v998 = vmul.f32 %v983, %v991
        %v999 = vmul.f32 %v984, %v991
        %v1000 = vmul.f32 %v985, %v991
        %1001 = vadd.xlane.f32.xlu0 %v993
        %v1002 = vpop.xlane.xlu0 %1001
        %1003 = vadd.xlane.f32.xlu0 %v994
        %v1004 = vpop.xlane.xlu0 %1003
        %1005 = vadd.xlane.f32.xlu0 %v995
        %v1006 = vpop.xlane.xlu0 %1005
        %1007 = vadd.xlane.f32.xlu0 %v996
        %v1008 = vpop.xlane.xlu0 %1007
        %1009 = vadd.xlane.f32.xlu0 %v997
        %v1010 = vpop.xlane.xlu0 %1009
        %1011 = vadd.xlane.f32.xlu0 %v998
        %v1012 = vpop.xlane.xlu0 %1011
        %1013 = vadd.xlane.f32.xlu0 %v999
        %v1014 = vpop.xlane.xlu0 %1013
        %1015 = vadd.xlane.f32.xlu0 %v1000
        %v1016 = vpop.xlane.xlu0 %1015
        %s1017 = sld [smem:[#allocation2]]
        %v1018 = vstv %s1017
        %v1019 = vadd.f32 %v1002, %v1018
        %v1020 = vadd.f32 %v1004, %v1018
        %v1021 = vadd.f32 %v1006, %v1018
        %v1022 = vadd.f32 %v1008, %v1018
        %v1023 = vadd.f32 %v1010, %v1018
        %v1024 = vadd.f32 %v1012, %v1018
        %v1025 = vadd.f32 %v1014, %v1018
        %v1026 = vadd.f32 %v1016, %v1018
        %v1027 = vmul.f32 %v1019, %v406
        %v1028 = vmul.f32 %v1020, %v407
        %v1029 = vmul.f32 %v1021, %v408
        %v1030 = vmul.f32 %v1022, %v409
        %v1031 = vmul.f32 %v1023, %v410
        %v1032 = vmul.f32 %v1024, %v411
        %v1033 = vmul.f32 %v1025, %v412
        %v1034 = vmul.f32 %v1026, %v413
        %v1035 = vrot.slane %v1027, 4
        %v1036 = vadd.f32 %v1027, %v1035
        %v1037 = vrot.slane %v1036, 2
        %v1038 = vadd.f32 %v1036, %v1037
        %v1039 = vrot.slane %v1038, 1
        %v1040 = vadd.f32 %v1038, %v1039
        %v1041 = vrot.slane %v1028, 4
        %v1042 = vadd.f32 %v1028, %v1041
        %v1043 = vrot.slane %v1042, 2
        %v1044 = vadd.f32 %v1042, %v1043
        %v1045 = vrot.slane %v1044, 1
        %v1046 = vadd.f32 %v1044, %v1045
        %v1047 = vrot.slane %v1029, 4
        %v1048 = vadd.f32 %v1029, %v1047
        %v1049 = vrot.slane %v1048, 2
        %v1050 = vadd.f32 %v1048, %v1049
        %v1051 = vrot.slane %v1050, 1
        %v1052 = vadd.f32 %v1050, %v1051
        %v1053 = vrot.slane %v1030, 4
        %v1054 = vadd.f32 %v1030, %v1053
        %v1055 = vrot.slane %v1054, 2
        %v1056 = vadd.f32 %v1054, %v1055
        %v1057 = vrot.slane %v1056, 1
        %v1058 = vadd.f32 %v1056, %v1057
        %v1059 = vrot.slane %v1031, 4
        %v1060 = vadd.f32 %v1031, %v1059
        %v1061 = vrot.slane %v1060, 2
        %v1062 = vadd.f32 %v1060, %v1061
        %v1063 = vrot.slane %v1062, 1
        %v1064 = vadd.f32 %v1062, %v1063
        %v1065 = vrot.slane %v1032, 4
        %v1066 = vadd.f32 %v1032, %v1065
        %v1067 = vrot.slane %v1066, 2
        %v1068 = vadd.f32 %v1066, %v1067
        %v1069 = vrot.slane %v1068, 1
        %v1070 = vadd.f32 %v1068, %v1069
        %v1071 = vrot.slane %v1033, 4
        %v1072 = vadd.f32 %v1033, %v1071
        %v1073 = vrot.slane %v1072, 2
        %v1074 = vadd.f32 %v1072, %v1073
        %v1075 = vrot.slane %v1074, 1
        %v1076 = vadd.f32 %v1074, %v1075
        %v1077 = vrot.slane %v1034, 4
        %v1078 = vadd.f32 %v1034, %v1077
        %v1079 = vrot.slane %v1078, 2
        %v1080 = vadd.f32 %v1078, %v1079
        %v1081 = vrot.slane %v1080, 1
        %v1082 = vadd.f32 %v1080, %v1081
        %vm1091 = vcmask 1041409
        %v1092 = vsel %vm1091, %v1046, %v1040
        %vm1093 = vcmask 1042434
        %v1094 = vsel %vm1093, %v1052, %v1092
        %vm1095 = vcmask 1043459
        %v1096 = vsel %vm1095, %v1058, %v1094
        %vm1097 = vcmask 1044484
        %v1098 = vsel %vm1097, %v1064, %v1096
        %vm1099 = vcmask 1045509
        %v1100 = vsel %vm1099, %v1070, %v1098
        %vm1101 = vcmask 1046534
        %v1102 = vsel %vm1101, %v1076, %v1100
        %vm1103 = vcmask 1047559
        %v1104 = vsel %vm1103, %v1082, %v1102
        %1106 = vst [vmem:[%s404] sm:$0xff] %v1104
        %s1107 = sand.u32 %s216, 1
        %s1108 = scalar_lea.sflag [#allocation5], %s1107
        %s1109 = sand.u32 %s216, 1
        %s1110 = smul.addr %s1109, 8
        %s1111 = scalar_lea.vmem [#allocation12], %s1110
        // Predicated region
        $region73: #{tpu_custom_call.1} parent=51 // pred_check
          %p1112 = pneg %p226
        $region74: #{tpu_custom_call.1} parent=51 // pred_check_branch
          %1114 = sbr.rel (%p1112) target = $region76
        $region75: #{tpu_custom_call.1} parent=51 // pred_region
          %s1116 = ssub.s32 128, 128
          %1117 = vsyncadd %s1108, %s1116
          %s1118 = smul.addr %s30, 128
          %s1119 = scalar_lea.hbm %s8, %s1118
          %s1121 = sshll.u32 %s1111, 4
          %s1122 = int_to_ptr.vmem [resolvable:$true] %s1121
          %1124 = dma.vmem_to_hbm [thread:$0]  %s1122, 128, %s1119, %s1108
        $region76: #{tpu_custom_call.1} parent=51 // pred_fallthru
          _
      $region52: #{tpu_custom_call.1} parent=5 // pred_fallthru
        _
      %p1125 = scmp.le.s32.totalorder 2, %s25
      // Predicated region
      $region77: #{tpu_custom_call.1} parent=5 // pred_check
        %p1126 = pneg %p1125
      $region78: #{tpu_custom_call.1} parent=5 // pred_check_branch
        %1128 = sbr.rel (%p1126) target = $region80
      $region79: #{tpu_custom_call.1} parent=5 // pred_region
        %s1129 = ssub.s32 %s25, 2
        // Predicated region
        $region81: #{tpu_custom_call.1} parent=79 // pred_check
          %p1130 = pneg %p232
        $region82: #{tpu_custom_call.1} parent=79 // pred_check_branch
          %1132 = sbr.rel (%p1130) target = $region84
        $region83: #{tpu_custom_call.1} parent=79 // pred_region
          %s1133 = sand.u32 %s217, 1
          %s1134 = scalar_lea.sflag [#allocation5], %s1133
          %s1135 = sand.u32 %s217, 1
          %s1136 = smul.addr %s1135, 8
          %s1137 = scalar_lea.vmem [#allocation12], %s1136
          %1138 = dma.done %s1134, 128
        $region84: #{tpu_custom_call.1} parent=79 // pred_fallthru
          _
      $region80: #{tpu_custom_call.1} parent=5 // pred_fallthru
        _
    $region6: #{tpu_custom_call.1} parent=1 // loop_footer
      %s29 = sadd.s32 1, %s25
    $region7: #{tpu_custom_call.1} parent=1 // loop_footer_branch
      %24 = sbr.rel target = $region3
    $region8: #{tpu_custom_call.1} parent=1 // loop_exit
      _
    %1139 = vsyncpa [#allocation4], 1
    %s1140 = scalar_lea.sflag [#allocation4], 1
    %1141 = vsyncpa %s1140, 1
    %1142 = vsyncpa [#allocation7], 1
    %s1143 = scalar_lea.sflag [#allocation7], 1
    %1144 = vsyncpa %s1143, 1
    %1145 = vsyncpa [#allocation10], 1
    %1146 = vsyncpa [#allocation5], 1
    %s1147 = scalar_lea.sflag [#allocation5], 1
    %1148 = vsyncpa %s1147, 1

</llo_original>
